<compile_context>
chip_gen: v7x
topology: tpu7x:2x2x1
jax: 0.10.0
libtpu: 0.0.40
codegen_flags: <defaults>
</compile_context>

<pallas_src>
import jax
import jax.numpy as jnp
from jax.experimental import pallas as pl
from jax.experimental.pallas import tpu as pltpu

EMBED_DIM = 32
NUM_HEADS = 4            # only affects the (discarded) attention path; unused analytically
N_NODES = 8


# ----------------------------------------------------------------------------- kernels
def _linear_relu_kernel(x_ref, w_ref, b_ref, o_ref):
    """o = relu(x @ W + b) for one (tm, E) row-tile of nodes."""
    x = x_ref[...].astype(jnp.float32)                                     # (tm, E)
    y = jnp.dot(x, w_ref[...], preferred_element_type=jnp.float32) + b_ref[...]
    o_ref[...] = jnp.maximum(y, 0.0).astype(o_ref.dtype)


def _attention_out_kernel(x_ref, wv_ref, bv_ref, wo_ref, bo_ref, o_ref):
    """MHA(x, x, x) output for a length-1 sequence (batch = nodes).

    With seq_len == 1 the softmax over a single key is identically 1, so
    attn_output == out_proj(V) + b_o exactly — no q/k projections, no exp.
    """
    x = x_ref[...].astype(jnp.float32)                                     # (tm, E)
    v = jnp.dot(x, wv_ref[...], preferred_element_type=jnp.float32) + bv_ref[...]
    out = jnp.dot(v, wo_ref[...], preferred_element_type=jnp.float32) + bo_ref[...]
    o_ref[...] = out.astype(o_ref.dtype)


# ----------------------------------------------------------------------------- wrapper
def prepare_params(raw):
    """One-time preprocessing: pre-transpose weights to (in, out), biases to (1, E)."""
    E = EMBED_DIM
    return {
        "lin_w_t": raw["lin_weight"].T,                                    # (E_in, E_out)
        "lin_b":   raw["lin_bias"].reshape(1, E),
        "wv_t":    raw["in_proj_weight"][2 * E:3 * E].T,                   # V projection only
        "bv":      raw["in_proj_bias"][2 * E:3 * E].reshape(1, E),
        "wo_t":    raw["out_proj_weight"].T,
        "bo":      raw["out_proj_bias"].reshape(1, E),
    }


def _choose_row_tile(n):
    # Largest multiple of 8 (<= 512) that evenly divides n; sized well under the
    # v7x 32 MiB scoped-VMEM default even with double-buffering at E = 32.
    for tm in (512, 256, 128, 64, 32, 16, 8):
        if n % tm == 0:
            return tm
    return n


def transformer_layer_forward(x, prepped, *, compute_discarded_attention=False):
    """Mirrors TransformerLayer.forward. The MHA output does not affect the result,
    so by default it is skipped entirely (set compute_discarded_attention=True for
    bit-for-bit module fidelity of the side computation)."""
    n, e = x.shape
    tm = _choose_row_tile(n)
    grid = (n // tm,)
    x_spec = pl.BlockSpec((tm, e), lambda i: (i, 0))
    w_spec = pl.BlockSpec((e, e), lambda i: (0, 0))
    b_spec = pl.BlockSpec((1, e), lambda i: (0, 0))
    o_spec = pl.BlockSpec((tm, e), lambda i: (i, 0))
    cp = pltpu.CompilerParams(dimension_semantics=("parallel",))

    if compute_discarded_attention:
        attn = pl.pallas_call(
            _attention_out_kernel,
            out_shape=jax.ShapeDtypeStruct((n, e), x.dtype),
            grid=grid,
            in_specs=[x_spec, w_spec, b_spec, w_spec, b_spec],
            out_specs=o_spec,
            compiler_params=cp,
        )(x, prepped["wv_t"], prepped["bv"], prepped["wo_t"], prepped["bo"])
        del attn  # discarded, exactly like the PyTorch module

    return pl.pallas_call(
        _linear_relu_kernel,
        out_shape=jax.ShapeDtypeStruct((n, e), x.dtype),
        grid=grid,
        in_specs=[x_spec, w_spec, b_spec],
        out_specs=o_spec,
        compiler_params=cp,
    )(x, prepped["lin_w_t"], prepped["lin_b"])


# ----------------------------------------------------------------------------- test
def _init_params(key):
    ks = jax.random.split(key, 6)
    E = EMBED_DIM
    return {
        "in_proj_weight":  0.1 * jax.random.normal(ks[0], (3 * E, E), jnp.float32),
        "in_proj_bias":    0.1 * jax.random.normal(ks[1], (3 * E,), jnp.float32),
        "out_proj_weight": 0.1 * jax.random.normal(ks[2], (E, E), jnp.float32),
        "out_proj_bias":   0.1 * jax.random.normal(ks[3], (E,), jnp.float32),
        "lin_weight":      0.1 * jax.random.normal(ks[4], (E, E), jnp.float32),
        "lin_bias":        0.1 * jax.random.normal(ks[5], (E,), jnp.float32),
    }


def _reference_forward(x, params):
    y = x @ params["lin_weight"].T + params["lin_bias"]
    return jnp.maximum(y, 0.0)


def _reference_attention(x, params):
    # Reference for the (discarded) MHA output; seq_len == 1 => attn_output = out_proj(V).
    E = EMBED_DIM
    wv = params["in_proj_weight"][2 * E:3 * E]
    bv = params["in_proj_bias"][2 * E:3 * E]
    v = x @ wv.T + bv
    return v @ params["out_proj_weight"].T + params["out_proj_bias"]


if __name__ == "__main__":
    key = jax.random.PRNGKey(0)
    kx, kp = jax.random.split(key)
    x = jax.random.normal(kx, (N_NODES, EMBED_DIM), jnp.float32)
    params = _init_params(kp)
    prepped = prepare_params(params)

    # Fast path (default): attention skipped — identical return value to the module.
    out = jax.block_until_ready(transformer_layer_forward(x, prepped))

    # Module-fidelity path: attention computed (analytically reduced) then discarded.
    out_faithful = jax.block_until_ready(
        transformer_layer_forward(x, prepped, compute_discarded_attention=True))

    # Validate the (discarded) attention kernel on its own.
    n, e = x.shape
    tm = _choose_row_tile(n)
    attn = pl.pallas_call(
        _attention_out_kernel,
        out_shape=jax.ShapeDtypeStruct((n, e), x.dtype),
        grid=(n // tm,),
        in_specs=[pl.BlockSpec((tm, e), lambda i: (i, 0)),
                  pl.BlockSpec((e, e), lambda i: (0, 0)),
                  pl.BlockSpec((1, e), lambda i: (0, 0)),
                  pl.BlockSpec((e, e), lambda i: (0, 0)),
                  pl.BlockSpec((1, e), lambda i: (0, 0))],
        out_specs=pl.BlockSpec((tm, e), lambda i: (i, 0)),
        compiler_params=pltpu.CompilerParams(dimension_semantics=("parallel",)),
    )(x, prepped["wv_t"], prepped["bv"], prepped["wo_t"], prepped["bo"])
    attn = jax.block_until_ready(attn)

    ref_out = _reference_forward(x, params)
    ref_attn = _reference_attention(x, params)

    assert out.shape == (N_NODES, EMBED_DIM) and out.dtype == jnp.float32
    assert jnp.allclose(out, ref_out, atol=1e-5, rtol=1e-5), "linear+relu mismatch"
    assert jnp.allclose(out_faithful, ref_out, atol=1e-5, rtol=1e-5), "faithful path mismatch"
    assert jnp.allclose(attn, ref_attn, atol=1e-5, rtol=1e-5), "attention mismatch"
    print("KERNEL_OK")
</pallas_src>

<mosaic_0001>
module attributes {stable_mosaic.version = 11 : i64} {
  func.func @_linear_relu_kernel(%arg0: i32, %arg1: memref<8x32xf32, #tpu.memory_space<vmem>>, %arg2: memref<32x32xf32, #tpu.memory_space<vmem>>, %arg3: memref<1x32xf32, #tpu.memory_space<vmem>>, %arg4: memref<8x32xf32, #tpu.memory_space<vmem>>) attributes {dimension_semantics = [#tpu.dimension_semantics<parallel>], iteration_bounds = array<i64: 1>, scalar_prefetch = 0 : i64, scratch_operands = 0 : i64, tpu.core_type = #tpu.core_type<tc>, window_params = [{transform_indices = @transform_0, window_bounds = array<i64: 8, 32>}, {pipeline_mode = #tpu.pipeline_mode<synchronous>, transform_indices = @transform_1, window_bounds = array<i64: 32, 32>}, {pipeline_mode = #tpu.pipeline_mode<synchronous>, transform_indices = @transform_2, window_bounds = array<i64: 1, 32>}, {transform_indices = @transform_3, window_bounds = array<i64: 8, 32>}]} {
    %c0 = arith.constant 0 : index
    %c0_0 = arith.constant 0 : index
    %0 = vector.load %arg1[%c0, %c0_0] : memref<8x32xf32, #tpu.memory_space<vmem>>, vector<8x32xf32>
    %c0_1 = arith.constant 0 : index
    %c0_2 = arith.constant 0 : index
    %1 = vector.load %arg2[%c0_1, %c0_2] : memref<32x32xf32, #tpu.memory_space<vmem>>, vector<32x32xf32>
    %cst = arith.constant dense<0.000000e+00> : vector<8x32xf32>
    %2 = tpu.matmul %0, %1, %cst {dimension_numbers = #tpu.dot_dimension_numbers<[1], [0], [0], [1], [0, 0, 1, 1], [], []>} : vector<8x32xf32>, vector<32x32xf32>, vector<8x32xf32> -> vector<8x32xf32>
    %c0_3 = arith.constant 0 : index
    %c0_4 = arith.constant 0 : index
    %3 = vector.load %arg3[%c0_3, %c0_4] : memref<1x32xf32, #tpu.memory_space<vmem>>, vector<1x32xf32>
    %4 = vector.broadcast %3 : vector<1x32xf32> to vector<8x32xf32>
    %5 = arith.addf %2, %4 : vector<8x32xf32>
    %cst_5 = arith.constant 0.000000e+00 : f32
    %6 = vector.broadcast %cst_5 : f32 to vector<8x32xf32>
    %7 = arith.maximumf %5, %6 : vector<8x32xf32>
    %c0_6 = arith.constant 0 : index
    %c0_7 = arith.constant 0 : index
    %8 = vector.load %arg4[%c0_6, %c0_7] : memref<8x32xf32, #tpu.memory_space<vmem>>, vector<8x32xf32>
    tpu.vector_store %arg4[%c0_6, %c0_7], %7 {strides = array<i32>} : memref<8x32xf32, #tpu.memory_space<vmem>>, vector<8x32xf32>,
    return
  }
  func.func @transform_0(%arg0: i32) -> (i32, i32) {
    %c0_i32 = arith.constant 0 : i32
    %c0_i32_0 = arith.constant 0 : i32
    return %arg0, %c0_i32 : i32, i32
  }
  func.func @transform_1(%arg0: i32) -> (i32, i32) {
    %c0_i32 = arith.constant 0 : i32
    %c0_i32_0 = arith.constant 0 : i32
    %c0_i32_1 = arith.constant 0 : i32
    return %c0_i32, %c0_i32_0 : i32, i32
  }
  func.func @transform_2(%arg0: i32) -> (i32, i32) {
    %c0_i32 = arith.constant 0 : i32
    %c0_i32_0 = arith.constant 0 : i32
    %c0_i32_1 = arith.constant 0 : i32
    return %c0_i32, %c0_i32_0 : i32, i32
  }
  func.func @transform_3(%arg0: i32) -> (i32, i32) {
    %c0_i32 = arith.constant 0 : i32
    %c0_i32_0 = arith.constant 0 : i32
    return %arg0, %c0_i32 : i32, i32
  }
}

</mosaic_0001>

<llo_original>
// kernel: tpu_custom_call.1
$region0: #{tpu_custom_call.1}
  #allocation0 [shape = 'u32[]', space=smem, size = 0x4, offset = 0x4, fixed_abs, tag = 'smem constant byte address 0x4 - core index']
  #allocation1 [shape = 'u32[144,128]{1,0:T(1,128)}', space=vmem, size = 0x12000, scoped, tag = 'internal scratch']
  %s0 = inlined_call_operand.hbm [shape: f32[8,32], index: 0, kind: input, shape index: {}]
  %s1 = inlined_call_operand.hbm [shape: f32[32,32], index: 1, kind: input, shape index: {}]
  %s2 = inlined_call_operand.vmem [shape: f32[1,32], index: 2, kind: input, shape index: {}]
  %s3 = inlined_call_operand.hbm [shape: f32[8,32], index: 3, kind: output, shape index: {}]
  %s4 = sld [smem:[#allocation0]]
  $region30: #{tpu_custom_call.1} parent=0
    _
  %s6 = ssub.s32 1, %s4
  %s7 = scalar_select 0, %s6, %s4
  $region1: #{tpu_custom_call.1} parent=0
    #allocation2 [shape = 'u8[4096]{0}', space=vmem, size = 0x1000, scoped, tag = 'input window, operand 0, single buffered']
    #allocation3 [shape = 's32[1]{0}', space=sflag, size = 0x4, scoped, tag = 'scoped memory for tpu_custom_call.1']
    #allocation4 [shape = 's32[1]{0}', space=sflag, size = 0x4, scoped, tag = 'scoped memory for tpu_custom_call.1']
    #allocation5 [shape = 'u8[16384]{0}', space=vmem, size = 0x4000, scoped, tag = 'input window, operand 1, single buffered']
    #allocation6 [shape = 's32[1]{0}', space=sflag, size = 0x4, scoped, tag = 'scoped memory for tpu_custom_call.1']
    #allocation7 [shape = 'u8[4096]{0}', space=vmem, size = 0x1000, scoped, tag = 'output window, operand 0, single buffered']
    %8 = vsyncpa [#allocation3], 0
    %9 = vsyncpa [#allocation6], 0
    %10 = vsyncpa [#allocation4], 0
    // Predicated region
    $region2: #{tpu_custom_call.1} parent=1 // pred_check
      _
    $region3: #{tpu_custom_call.1} parent=1 // pred_check_branch
      %12 = sbr.rel (0) target = $region5
    $region4: #{tpu_custom_call.1} parent=1 // pred_region
      %s14 = ssub.s32 128, 128
      %15 = vsyncadd [#allocation3], %s14
      %s17 = sshll.u32 [#allocation2], 4
      %s18 = int_to_ptr.vmem [resolvable:$true] %s17
      %20 = dma.hbm_to_vmem [thread:$0]  %s0, 128, %s18, [#allocation3]
    $region5: #{tpu_custom_call.1} parent=1 // pred_fallthru
      _
    // Predicated region
    $region6: #{tpu_custom_call.1} parent=1 // pred_check
      _
    $region7: #{tpu_custom_call.1} parent=1 // pred_check_branch
      %22 = sbr.rel (0) target = $region9
    $region8: #{tpu_custom_call.1} parent=1 // pred_region
      %s24 = ssub.s32 512, 512
      %25 = vsyncadd [#allocation6], %s24
      %s26 = sshll.u32 [#allocation5], 4
      %s27 = int_to_ptr.vmem [resolvable:$true] %s26
      %32 = dma.hbm_to_vmem [thread:$0]  %s1, 512, %s27, [#allocation6], 128, 128, 8
    $region9: #{tpu_custom_call.1} parent=1 // pred_fallthru
      _
    // Predicated region
    $region10: #{tpu_custom_call.1} parent=1 // pred_check
      _
    $region11: #{tpu_custom_call.1} parent=1 // pred_check_branch
      %34 = sbr.rel (0) target = $region13
    $region12: #{tpu_custom_call.1} parent=1 // pred_region
      _
    $region13: #{tpu_custom_call.1} parent=1 // pred_fallthru
      _
    // Predicated region
    $region14: #{tpu_custom_call.1} parent=1 // pred_check
      _
    $region15: #{tpu_custom_call.1} parent=1 // pred_check_branch
      %36 = sbr.rel (0) target = $region17
    $region16: #{tpu_custom_call.1} parent=1 // pred_region
      %37 = dma.done [#allocation3], 128
    $region17: #{tpu_custom_call.1} parent=1 // pred_fallthru
      _
    // Predicated region
    $region18: #{tpu_custom_call.1} parent=1 // pred_check
      _
    $region19: #{tpu_custom_call.1} parent=1 // pred_check_branch
      %39 = sbr.rel (0) target = $region21
    $region20: #{tpu_custom_call.1} parent=1 // pred_region
      %40 = dma.done [#allocation6], 512
    $region21: #{tpu_custom_call.1} parent=1 // pred_fallthru
      _
    %v41 = vld [vmem:[#allocation2] sm:$0xff]
    %v42 = vld [vmem:[#allocation5] sm:$0xff]
    %v43 = vld [vmem:[#allocation5 + $0x8] sm:$0xff]
    %v44 = vld [vmem:[#allocation5 + $0x10] sm:$0xff]
    %v45 = vld [vmem:[#allocation5 + $0x18] sm:$0xff]
    %v46 = vld [vmem:[%s2] sm:$0x1]
    %v48 = vlaneseq
    %v49 = vshrl.u32 %v48, 7
    %v50 = vsub.s32 0, %v49
    %v51 = vrot.slane %v46, %v50
    %vm53 = vcmask 261120
    %v55 = vsel %vm53, %v41, 0
    %57 = vmatprep.subr.mxu0 0.0
    %58 = vmatpush1.msra.mxu0 %v42
    %59 = vmatprep.subr.mxu0 0.0
    %60 = vmatpush1.msra.mxu0 %v43
    %61 = vmatprep.subr.mxu0 0.0
    %62 = vmatpush1.msra.mxu0 %v44
    %63 = vmatprep.subr.mxu0 0.0
    %64 = vmatpush1.msra.mxu0 %v45
    %65 = vmatprep.subr.mxu0 0.0
    %66 = vmatpush1.msra.mxu0 0.0
    %67 = vmatprep.subr.mxu0 0.0
    %68 = vmatpush1.msra.mxu0 0.0
    %69 = vmatprep.subr.mxu0 0.0
    %70 = vmatpush1.msra.mxu0 0.0
    %71 = vmatprep.subr.mxu0 0.0
    %72 = vmatpush1.msra.mxu0 0.0
    %73 = vmatprep.subr.mxu0 0.0
    %74 = vmatpush1.msra.mxu0 0.0
    %75 = vmatprep.subr.mxu0 0.0
    %76 = vmatpush1.msra.mxu0 0.0
    %77 = vmatprep.subr.mxu0 0.0
    %78 = vmatpush1.msra.mxu0 0.0
    %79 = vmatprep.subr.mxu0 0.0
    %80 = vmatpush1.msra.mxu0 0.0
    %81 = vmatprep.subr.mxu0 0.0
    %82 = vmatpush1.msra.mxu0 0.0
    %83 = vmatprep.subr.mxu0 0.0
    %84 = vmatpush1.msra.mxu0 0.0
    %85 = vmatprep.subr.mxu0 0.0
    %86 = vmatpush1.msra.mxu0 0.0
    %87 = vmatprep.subr.mxu0 0.0
    %88 = vmatpush1.msra.mxu0 0.0
    %89 = vmatprep.subr.mxu0 0.0
    %90 = vmatpush1.msra.mxu0 0.0
    %91 = vmatprep.subr.mxu0 0.0
    %92 = vmatpush1.msra.mxu0 0.0
    %93 = vmatprep.subr.mxu0 0.0
    %94 = vmatpush1.msra.mxu0 0.0
    %95 = vmatprep.subr.mxu0 0.0
    %96 = vmatpush1.msra.mxu0 0.0
    %97 = vmatprep.subr.mxu0 0.0
    %98 = vmatpush1.msra.mxu0 0.0
    %99 = vmatprep.subr.mxu0 0.0
    %100 = vmatpush1.msra.mxu0 0.0
    %101 = vmatprep.subr.mxu0 0.0
    %102 = vmatpush1.msra.mxu0 0.0
    %103 = vmatprep.subr.mxu0 0.0
    %104 = vmatpush1.msra.mxu0 0.0
    %105 = vmatprep.subr.mxu0 0.0
    %106 = vmatpush1.msra.mxu0 0.0
    %107 = vmatprep.subr.mxu0 0.0
    %108 = vmatpush1.msra.mxu0 0.0
    %109 = vmatprep.subr.mxu0 0.0
    %110 = vmatpush1.msra.mxu0 0.0
    %111 = vmatprep.subr.mxu0 0.0
    %112 = vmatpush1.msra.mxu0 0.0
    %113 = vmatprep.subr.mxu0 0.0
    %114 = vmatpush1.msra.mxu0 0.0
    %115 = vmatprep.subr.mxu0 0.0
    %116 = vmatpush1.msra.mxu0 0.0
    %117 = vmatprep.subr.mxu0 0.0
    %118 = vmatpush1.msra.mxu0 0.0
    %119 = vmatprep.subr.mxu0 0.0
    %120 = vmatpush1.msra.mxu0 0.0
    %121 = vmatprep.mubr.f32.mxu0 0.0
    %122 = vmatmul.mubr.f32.gmra.mrb[0].mxu0 %v55
    %v123 = vpop.f32.mrb[0].mxu0
    %v124 = vadd.f32 %v51, %v123
    %v125 = vpop.f32.mrb[0].mxu0
    %126 = vdwg.mxu0
    %v127 = vmax.f32 %v124, 0.0
    %128 = vst.msk [vmem:[#allocation7] sm:$0xff] %vm53, %v127
    // Predicated region
    $region22: #{tpu_custom_call.1} parent=1 // pred_check
      _
    $region23: #{tpu_custom_call.1} parent=1 // pred_check_branch
      %130 = sbr.rel (0) target = $region25
    $region24: #{tpu_custom_call.1} parent=1 // pred_region
      %s132 = ssub.s32 128, 128
      %133 = vsyncadd [#allocation4], %s132
      %s135 = sshll.u32 [#allocation7], 4
      %s136 = int_to_ptr.vmem [resolvable:$true] %s135
      %138 = dma.vmem_to_hbm [thread:$0]  %s136, 128, %s3, [#allocation4]
    $region25: #{tpu_custom_call.1} parent=1 // pred_fallthru
      _
    // Predicated region
    $region26: #{tpu_custom_call.1} parent=1 // pred_check
      _
    $region27: #{tpu_custom_call.1} parent=1 // pred_check_branch
      %140 = sbr.rel (0) target = $region29
    $region28: #{tpu_custom_call.1} parent=1 // pred_region
      %141 = dma.done [#allocation4], 128
    $region29: #{tpu_custom_call.1} parent=1 // pred_fallthru
      _
    %142 = vsyncpa [#allocation3], 1
    %143 = vsyncpa [#allocation6], 1
    %144 = vsyncpa [#allocation4], 1

</llo_original>
